<compile_context>
chip_gen: v7x
topology: tpu7x:2x2x1
jax: 0.10.0
libtpu: 0.0.40
codegen_flags: <defaults>
</compile_context>

<pallas_src>
import jax
import jax.numpy as jnp
from jax.experimental import pallas as pl
from jax.experimental.pallas import tpu as pltpu


def _sine_kernel(x_ref, o_ref):
    x = x_ref[...]
    if x.dtype.itemsize < 4:
        # Narrow dtypes: compute in f32 for parity with torch.sin, cast back.
        # TODO(synk): on v6e/v7x a bf16 polynomial tail would halve VALU work;
        # kept in f32 until the numerics budget is validated.
        o_ref[...] = jnp.sin(x.astype(jnp.float32)).astype(o_ref.dtype)
    else:
        o_ref[...] = jnp.sin(x)


_LANE_CANDIDATES = (8192, 4096, 2048, 1024, 512, 256, 128)  # widest first
_TARGET_BLOCK_BYTES = 4 * 1024 * 1024      # ~4 MiB block: HBM-roofline plateau
_PIPELINE_THRESHOLD_BYTES = 512 * 1024     # above this, force a multi-step grid
_MIN_PIPELINE_STEPS = 4                    # enough steps to hide an HBM pass
_MIN_KERNEL_ELEMS = 1024                   # below this, launch overhead wins
_VMEM_LIMIT_BYTES = 32 * 1024 * 1024       # 4 live ~4 MiB buffers + headroom


def _pick_lanes(n: int):
    """Widest lane-dense last dim that divides n, preferring >= 8 rows."""
    fallback = None
    for lane in _LANE_CANDIDATES:
        if n % lane == 0:
            if n // lane >= 8:
                return lane
            if fallback is None:
                fallback = lane
    return fallback


def _pick_block_rows(rows: int, lanes: int, itemsize: int) -> int:
    """Row-block size: ~4 MiB blocks, >= 4 (even) grid steps for medium slabs."""
    sublane_mult = max(8, 32 // itemsize)    # 8 f32 / 16 bf16 / 32 int8-fp8
    if rows <= sublane_mult:
        return rows                          # single full-extent block (legal)

    bytes_per_row = lanes * itemsize
    slab_bytes = rows * bytes_per_row

    steps = max(1, pl.cdiv(slab_bytes, _TARGET_BLOCK_BYTES))
    if slab_bytes >= _PIPELINE_THRESHOLD_BYTES:
        steps = max(steps, _MIN_PIPELINE_STEPS)   # keep the DMA pipeline busy
    if steps > 1 and steps % 2:
        steps += 1                                # even split across 2 TCs (v7x)
    steps = min(steps, pl.cdiv(rows, sublane_mult))
    steps = max(steps, 1)

    block_rows = pl.cdiv(rows, steps)
    block_rows = pl.cdiv(block_rows, sublane_mult) * sublane_mult
    return min(block_rows, rows)


def _sine_impl(x: jax.Array) -> jax.Array:
    orig_shape = x.shape
    dtype = x.dtype
    n = x.size

    lanes = _pick_lanes(n)
    if lanes is None or n < _MIN_KERNEL_ELEMS:
        # Ragged / tiny inputs: pad-copy or launch overhead would dominate.
        return jnp.sin(x)

    rows = n // lanes                  # exact: no pad, no trailing slice
    slab = x.reshape(rows, lanes)      # free metadata reshape (lane-dense)

    itemsize = dtype.itemsize
    block_rows = _pick_block_rows(rows, lanes, itemsize)
    grid = (pl.cdiv(rows, block_rows),)

    out = pl.pallas_call(
        _sine_kernel,
        out_shape=jax.ShapeDtypeStruct((rows, lanes), dtype),
        grid=grid,
        in_specs=[pl.BlockSpec((block_rows, lanes), lambda i: (i, 0))],
        out_specs=pl.BlockSpec((block_rows, lanes), lambda i: (i, 0)),
        compiler_params=pltpu.CompilerParams(
            dimension_semantics=("parallel",),
            vmem_limit_bytes=_VMEM_LIMIT_BYTES,
        ),
        cost_estimate=pl.CostEstimate(
            flops=8 * n,               # rough polynomial cost of sin
            transcendentals=n,
            bytes_accessed=2 * n * itemsize,
        ),
    )(slab)

    return out.reshape(orig_shape)


sine = jax.jit(_sine_impl)


if __name__ == "__main__":
    key = jax.random.PRNGKey(0)

    # Primary test: small NCHW input (2048 elems -> lanes=256, rows=8,
    # single-block kernel path).
    x = jax.random.normal(key, (2, 4, 16, 16), dtype=jnp.float32)
    y = jax.block_until_ready(sine(x))
    assert y.shape == x.shape and y.dtype == x.dtype
    assert jnp.allclose(y, jnp.sin(x), atol=1e-6, rtol=1e-6)

    # Multi-step grid with a partial (masked) last block:
    # 5*8*104*128 = 532480 elems -> lanes=8192, rows=65, block_rows=24, grid=(3,).
    k2 = jax.random.PRNGKey(1)
    x2 = jax.random.normal(k2, (5, 8, 104, 128), dtype=jnp.float32)
    y2 = jax.block_until_ready(sine(x2))
    assert jnp.allclose(y2, jnp.sin(x2), atol=1e-6, rtol=1e-6)

    # Narrow-dtype path (f32 compute inside the kernel, cast back to bf16).
    x3 = jax.random.normal(key, (2, 4, 16, 16), dtype=jnp.bfloat16)
    y3 = jax.block_until_ready(sine(x3))
    assert y3.dtype == jnp.bfloat16
    assert jnp.allclose(y3.astype(jnp.float32),
                        jnp.sin(x3.astype(jnp.float32)), atol=1e-2, rtol=1e-2)

    # Ragged-size fallback path (not a multiple of 128) stays correct.
    x4 = jax.random.normal(key, (3, 5, 7), dtype=jnp.float32)
    y4 = jax.block_until_ready(sine(x4))
    assert jnp.allclose(y4, jnp.sin(x4), atol=1e-6, rtol=1e-6)

    print("KERNEL_OK")
</pallas_src>

<mosaic_0001>
module attributes {stable_mosaic.version = 11 : i64} {
  func.func @_sine_kernel(%arg0: i32, %arg1: memref<8x256xf32, #tpu.memory_space<vmem>>, %arg2: memref<8x256xf32, #tpu.memory_space<vmem>>) attributes {dimension_semantics = [#tpu.dimension_semantics<parallel>], iteration_bounds = array<i64: 1>, scalar_prefetch = 0 : i64, scratch_operands = 0 : i64, tpu.core_type = #tpu.core_type<tc>, window_params = [{transform_indices = @transform_0, window_bounds = array<i64: 8, 256>}, {transform_indices = @transform_1, window_bounds = array<i64: 8, 256>}]} {
    %c0 = arith.constant 0 : index
    %c0_0 = arith.constant 0 : index
    %0 = vector.load %arg1[%c0, %c0_0] : memref<8x256xf32, #tpu.memory_space<vmem>>, vector<8x256xf32>
    %1 = math.sin %0 : vector<8x256xf32>
    %c0_1 = arith.constant 0 : index
    %c0_2 = arith.constant 0 : index
    %2 = vector.load %arg2[%c0_1, %c0_2] : memref<8x256xf32, #tpu.memory_space<vmem>>, vector<8x256xf32>
    tpu.vector_store %arg2[%c0_1, %c0_2], %1 {strides = array<i32>} : memref<8x256xf32, #tpu.memory_space<vmem>>, vector<8x256xf32>,
    return
  }
  func.func @transform_0(%arg0: i32) -> (i32, i32) {
    %c0_i32 = arith.constant 0 : i32
    %c0_i32_0 = arith.constant 0 : i32
    return %arg0, %c0_i32 : i32, i32
  }
  func.func @transform_1(%arg0: i32) -> (i32, i32) {
    %c0_i32 = arith.constant 0 : i32
    %c0_i32_0 = arith.constant 0 : i32
    return %arg0, %c0_i32 : i32, i32
  }
}

</mosaic_0001>

<llo_original>
// kernel: _sine_impl.1
$region0: #{_sine_impl.1}
  #allocation0 [shape = 'u32[]', space=smem, size = 0x4, offset = 0x4, fixed_abs, tag = 'smem constant byte address 0x4 - core index']
  #allocation1 [shape = 'u32[144,128]{1,0:T(1,128)}', space=vmem, size = 0x12000, scoped, tag = 'internal scratch']
  %s0 = inlined_call_operand.vmem [shape: f32[8,256], index: 0, kind: input, shape index: {}]
  %s1 = inlined_call_operand.vmem [shape: f32[8,256], index: 1, kind: output, shape index: {}]
  %s2 = sld [smem:[#allocation0]]
  $region14: #{_sine_impl.1} parent=0
    _
  %s4 = ssub.s32 1, %s2
  %s5 = scalar_select 0, %s4, %s2
  // Predicated region
  $region2: #{_sine_impl.1} parent=0 // pred_check
    _
  $region3: #{_sine_impl.1} parent=0 // pred_check_branch
    %7 = sbr.rel (0) target = $region5
  $region4: #{_sine_impl.1} parent=0 // pred_region
    _
  $region5: #{_sine_impl.1} parent=0 // pred_fallthru
    _
  %v8 = vld [vmem:[%s0] sm:$0xff]
  %v9 = vld [vmem:[%s0 + $0x8] sm:$0xff]
  %v10 = vand.u32 2147483647, %v8
  %vm11 = vcmp.le.f32.partialorder %v10, 0.7853982
  %vm12 = vcmp.lt.s32.totalorder %v8, 0
  %v13 = vand.u32 %v8, 2139095040
  %v14 = vshrl.u32 %v13, 23
  %v15 = vsub.s32 %v14, 127
  %v16 = vand.u32 2147483647, %v8
  %v17 = vand.u32 %v16, 8388607
  %v18 = vor.u32 %v17, 8388608
  %v19 = vsub.s32 0, %v18
  %v20 = vadd.s32 %v15, 1
  %vm21 = vcmp.gt.s32.totalorder %v20, 0
  %v22 = vsel %vm21, %v20, 0
  %v23 = vshrl.u32 %v22, 5
  %v24 = vand.u32 %v22, 31
  %v25 = vsub.s32 32, %v24
  %v26 = vshrl.u32 683565275, %v25
  %v27 = vshll.u32 683565275, %v24
  %v28 = vshrl.u32 2475754826, %v25
  %v29 = vor.u32 %v27, %v28
  %v30 = vshll.u32 2475754826, %v24
  %v31 = vshrl.u32 2131351028, %v25
  %v32 = vor.u32 %v30, %v31
  %v33 = vshll.u32 2131351028, %v24
  %v34 = vshrl.u32 2102212464, %v25
  %v35 = vor.u32 %v33, %v34
  %v36 = vshll.u32 2102212464, %v24
  %v37 = vshrl.u32 920167782, %v25
  %v38 = vor.u32 %v36, %v37
  %v39 = vshll.u32 920167782, %v24
  %v40 = vshrl.u32 1326507024, %v25
  %v41 = vor.u32 %v39, %v40
  %vm42 = vcmp.lt.s32.totalorder %v23, 1
  %vm43 = vcmp.lt.s32.totalorder %v23, 2
  %vm44 = vcmp.lt.s32.totalorder %v23, 3
  %vm45 = vcmp.lt.s32.totalorder %v23, 4
  %v46 = vsel %vm42, %v26, %v29
  %v47 = vsel %vm45, %v35, 2102212464
  %v48 = vsel %vm44, %v32, %v47
  %v49 = vsel %vm43, %v46, %v48
  %v50 = vsel %vm42, %v29, %v32
  %v51 = vsel %vm45, %v38, 920167782
  %v52 = vsel %vm44, %v35, %v51
  %v53 = vsel %vm43, %v50, %v52
  %v54 = vsel %vm42, %v32, %v35
  %v55 = vsel %vm45, %v41, 1326507024
  %v56 = vsel %vm44, %v38, %v55
  %v57 = vsel %vm43, %v54, %v56
  %v58 = vshll.u32 %v18, 8
  %v59 = vmul.u32.u64.compose %v58, %v57
  %v60 = vextract.low.u32 %v59
  %v61 = vextract.high.u32 %v59
  %v62 = vmul.u32.u64.compose %v58, %v53
  %v63 = vextract.low.u32 %v62
  %v64 = vextract.high.u32 %v62
  %v65 = vmul.u32 %v58, %v49
  %v66 = vadd.s32 %v61, %v63
  %vm67 = vc.u32 %v61, %v63
  %v68 = vadd.s32 %v64, 1
  %v69 = vsel %vm67, %v68, %v64
  %v70 = vadd.s32 %v65, %v69
  %v71 = vadd.s32 %v70, 536870912
  %v72 = vshrl.u32 %v71, 30
  %v73 = vshll.u32 %v72, 30
  %v74 = vsub.s32 %v70, %v73
  %vm75 = vcmp.lt.s32.totalorder %v74, 0
  %v76 = vsub.s32 0, %v74
  %v77 = vsel %vm75, %v76, %v74
  %v78 = vclz %v77
  %v79 = vsub.s32 %v78, 2
  %vm80 = vcmp.gt.s32.totalorder 0, %v79
  %v81 = vsel %vm80, 0, %v79
  %v82 = vsub.s32 32, %v81
  %v83 = vshll.u32 %v74, %v81
  %v84 = vshrl.u32 %v66, %v82
  %v85 = vor.u32 %v83, %v84
  %v86 = vsub.s32 4294967266, %v81
  %v87 = vadd.s32 %v86, 127
  %v88 = vshll.u32 %v87, 23
  %v89 = vor.u32 4788187, %v88
  %v90 = vand.u32 2147483647, %v89
  %v92 = vcvt.s32.f32 %v85
  %v93 = vmul.f32 %v92, %v90
  %v94 = vxor.u32 %v93, 2147483648
  %v95 = vsel %vm12, %v94, %v93
  %v96 = vsub.s32 4, %v72
  %v97 = vsel %vm12, %v96, %v72
  %v98 = vsel %vm11, %v8, %v95
  %v99 = vsel %vm11, 0, %v97
  %v100 = vcosq.f32.pop %v98
  %v101 = vsinq.f32.pop %v98
  %vm102 = vweird.f32 %v8
  %v103 = vadd.s32 %v99, 3
  %v104 = vand.u32 %v103, 3
  %vm105 = vcmp.lt.s32.totalorder %v104, 2
  %vm106 = vcmp.eq.s32.totalorder %v104, 0
  %v107 = vxor.u32 %v101, 2147483648
  %v108 = vsel %vm106, %v100, %v107
  %vm109 = vcmp.eq.s32.totalorder %v104, 2
  %v110 = vxor.u32 %v100, 2147483648
  %v111 = vsel %vm109, %v110, %v101
  %v112 = vsel %vm105, %v108, %v111
  %v113 = vsel %vm102, nan, %v112
  %v114 = vand.u32 2147483647, %v9
  %vm115 = vcmp.le.f32.partialorder %v114, 0.7853982
  %vm116 = vcmp.lt.s32.totalorder %v9, 0
  %v117 = vand.u32 %v9, 2139095040
  %v118 = vshrl.u32 %v117, 23
  %v119 = vsub.s32 %v118, 127
  %v120 = vand.u32 2147483647, %v9
  %v121 = vand.u32 %v120, 8388607
  %v122 = vor.u32 %v121, 8388608
  %v123 = vsub.s32 0, %v122
  %v124 = vadd.s32 %v119, 1
  %vm125 = vcmp.gt.s32.totalorder %v124, 0
  %v126 = vsel %vm125, %v124, 0
  %v127 = vshrl.u32 %v126, 5
  %v128 = vand.u32 %v126, 31
  %v129 = vsub.s32 32, %v128
  %v130 = vshrl.u32 683565275, %v129
  %v131 = vshll.u32 683565275, %v128
  %v132 = vshrl.u32 2475754826, %v129
  %v133 = vor.u32 %v131, %v132
  %v134 = vshll.u32 2475754826, %v128
  %v135 = vshrl.u32 2131351028, %v129
  %v136 = vor.u32 %v134, %v135
  %v137 = vshll.u32 2131351028, %v128
  %v138 = vshrl.u32 2102212464, %v129
  %v139 = vor.u32 %v137, %v138
  %v140 = vshll.u32 2102212464, %v128
  %v141 = vshrl.u32 920167782, %v129
  %v142 = vor.u32 %v140, %v141
  %v143 = vshll.u32 920167782, %v128
  %v144 = vshrl.u32 1326507024, %v129
  %v145 = vor.u32 %v143, %v144
  %vm146 = vcmp.lt.s32.totalorder %v127, 1
  %vm147 = vcmp.lt.s32.totalorder %v127, 2
  %vm148 = vcmp.lt.s32.totalorder %v127, 3
  %vm149 = vcmp.lt.s32.totalorder %v127, 4
  %v150 = vsel %vm146, %v130, %v133
  %v151 = vsel %vm149, %v139, 2102212464
  %v152 = vsel %vm148, %v136, %v151
  %v153 = vsel %vm147, %v150, %v152
  %v154 = vsel %vm146, %v133, %v136
  %v155 = vsel %vm149, %v142, 920167782
  %v156 = vsel %vm148, %v139, %v155
  %v157 = vsel %vm147, %v154, %v156
  %v158 = vsel %vm146, %v136, %v139
  %v159 = vsel %vm149, %v145, 1326507024
  %v160 = vsel %vm148, %v142, %v159
  %v161 = vsel %vm147, %v158, %v160
  %v162 = vshll.u32 %v122, 8
  %v163 = vmul.u32.u64.compose %v162, %v161
  %v164 = vextract.low.u32 %v163
  %v165 = vextract.high.u32 %v163
  %v166 = vmul.u32.u64.compose %v162, %v157
  %v167 = vextract.low.u32 %v166
  %v168 = vextract.high.u32 %v166
  %v169 = vmul.u32 %v162, %v153
  %v170 = vadd.s32 %v165, %v167
  %vm171 = vc.u32 %v165, %v167
  %v172 = vadd.s32 %v168, 1
  %v173 = vsel %vm171, %v172, %v168
  %v174 = vadd.s32 %v169, %v173
  %v175 = vadd.s32 %v174, 536870912
  %v176 = vshrl.u32 %v175, 30
  %v177 = vshll.u32 %v176, 30
  %v178 = vsub.s32 %v174, %v177
  %vm179 = vcmp.lt.s32.totalorder %v178, 0
  %v180 = vsub.s32 0, %v178
  %v181 = vsel %vm179, %v180, %v178
  %v182 = vclz %v181
  %v183 = vsub.s32 %v182, 2
  %vm184 = vcmp.gt.s32.totalorder 0, %v183
  %v185 = vsel %vm184, 0, %v183
  %v186 = vsub.s32 32, %v185
  %v187 = vshll.u32 %v178, %v185
  %v188 = vshrl.u32 %v170, %v186
  %v189 = vor.u32 %v187, %v188
  %v190 = vsub.s32 4294967266, %v185
  %v191 = vadd.s32 %v190, 127
  %v192 = vshll.u32 %v191, 23
  %v193 = vor.u32 4788187, %v192
  %v194 = vand.u32 2147483647, %v193
  %v196 = vcvt.s32.f32 %v189
  %v197 = vmul.f32 %v196, %v194
  %v198 = vxor.u32 %v197, 2147483648
  %v199 = vsel %vm116, %v198, %v197
  %v200 = vsub.s32 4, %v176
  %v201 = vsel %vm116, %v200, %v176
  %v202 = vsel %vm115, %v9, %v199
  %v203 = vsel %vm115, 0, %v201
  %v204 = vcosq.f32.pop %v202
  %v205 = vsinq.f32.pop %v202
  %vm206 = vweird.f32 %v9
  %v207 = vadd.s32 %v203, 3
  %v208 = vand.u32 %v207, 3
  %vm209 = vcmp.lt.s32.totalorder %v208, 2
  %vm210 = vcmp.eq.s32.totalorder %v208, 0
  %v211 = vxor.u32 %v205, 2147483648
  %v212 = vsel %vm210, %v204, %v211
  %vm213 = vcmp.eq.s32.totalorder %v208, 2
  %v214 = vxor.u32 %v204, 2147483648
  %v215 = vsel %vm213, %v214, %v205
  %v216 = vsel %vm209, %v212, %v215
  %v217 = vsel %vm206, nan, %v216
  %218 = vst [vmem:[%s1] sm:$0xff] %v113
  %219 = vst [vmem:[%s1 + $0x8] sm:$0xff] %v217
  // Predicated region
  $region6: #{_sine_impl.1} parent=0 // pred_check
    _
  $region7: #{_sine_impl.1} parent=0 // pred_check_branch
    %221 = sbr.rel (0) target = $region9
  $region8: #{_sine_impl.1} parent=0 // pred_region
    _
  $region9: #{_sine_impl.1} parent=0 // pred_fallthru
    _
  // Predicated region
  $region10: #{_sine_impl.1} parent=0 // pred_check
    _
  $region11: #{_sine_impl.1} parent=0 // pred_check_branch
    %223 = sbr.rel (0) target = $region13
  $region12: #{_sine_impl.1} parent=0 // pred_region
    _
  $region13: #{_sine_impl.1} parent=0 // pred_fallthru
    _

</llo_original>
